<compile_context>
chip_gen: v7x
topology: tpu7x:2x2x1
jax: 0.10.0
libtpu: 0.0.40
codegen_flags: <defaults>
</compile_context>

<pallas_src>
import functools

import jax
import jax.numpy as jnp
from jax.experimental import pallas as pl
from jax.experimental.pallas import tpu as pltpu

EPS = 1e-6

# dot_general dimension numbers: contract the LAST dim of both operands,
# i.e. A (M, K) . B (N, K) -> (M, N)  (the standard "q @ k.T" NT form).
_NT = (((1,), (1,)), ((), ()))


def _round_up(n, m):
    return ((n + m - 1) // m) * m


def idnn_kernel(x_ref, w1t_ref, b1_ref, w2t_ref, b2_ref, w3t_ref, b3_ref,
                w4t_ref, b4_ref, sel_ref, out_ref, *, eps, inv_tgt):
    x = x_ref[...]                                          # (TB, FULL_D) f32/bf16

    # contextnet, feature-major: h = W1_full^T @ x^T  (target columns of W1
    # are zero, so this equals concat(x[:,:s], x[:,e:]) @ W1, transposed).
    h = jax.lax.dot_general(w1t_ref[...], x, _NT,
                            preferred_element_type=jnp.float32)        # (H, TB)
    h = jnp.maximum(h + b1_ref[...], 0.0)
    z = jnp.dot(w2t_ref[...], h, preferred_element_type=jnp.float32)   # (Z, TB)
    z = z + b2_ref[...]

    # spherical projection: z / (||z||_2 + eps)  (exact divide, torch parity)
    ssq = jnp.sum(z * z, axis=0, keepdims=True)                         # (1, TB)
    z = z * (1.0 / (jnp.sqrt(ssq) + eps))

    # decoder, feature-major
    g = jnp.dot(w3t_ref[...], z, preferred_element_type=jnp.float32)   # (H, TB)
    g = jnp.maximum(g + b3_ref[...], 0.0)
    o = jnp.dot(w4t_ref[...], g, preferred_element_type=jnp.float32)   # (TGT, TB)
    o = o + b4_ref[...]

    # target_x, sliced + transposed through the MXU by the selection matrix
    # (no lane-offset slicing of x anywhere in the kernel).
    xt = jax.lax.dot_general(sel_ref[...], x, _NT,
                             preferred_element_type=jnp.float32)        # (TGT, TB)

    d = xt - o
    out_ref[...] = jnp.sum(d * d, axis=0, keepdims=True) * inv_tgt      # (1, TB)


def _prep_weights(params, s, e, full_d, x_dtype):
    """Fold slices into weights and pre-transpose for feature-major compute."""
    cw1 = params["cw1"]                      # (in_dim, H), in_dim = full_d - tgt
    hidden = cw1.shape[1]
    z_dim = params["cw2"].shape[1]
    tgt = e - s

    # Full-width first-layer weight with the target rows zeroed; replaces the
    # concat / split-matmul and is robust to s == 0 or e == full_d.
    cw1_full = jnp.zeros((full_d, hidden), jnp.float32)
    cw1_full = cw1_full.at[:s].set(cw1[:s].astype(jnp.float32))
    cw1_full = cw1_full.at[e:].set(cw1[s:].astype(jnp.float32))
    w1t = cw1_full.T.astype(x_dtype)                         # (H, full_d)

    # Selection matrix: picks + transposes x[:, s:e] via the MXU.
    sel = jnp.eye(full_d, dtype=jnp.float32)[s:e].astype(x_dtype)   # (tgt, full_d)

    w2t = params["cw2"].T.astype(jnp.float32)                # (Z, H)
    w3t = params["dw1"].T.astype(jnp.float32)                # (H, Z)
    w4t = params["dw2"].T.astype(jnp.float32)                # (tgt, H)
    b1 = params["cb1"].reshape(hidden, 1).astype(jnp.float32)
    b2 = params["cb2"].reshape(z_dim, 1).astype(jnp.float32)
    b3 = params["db1"].reshape(hidden, 1).astype(jnp.float32)
    b4 = params["db2"].reshape(tgt, 1).astype(jnp.float32)
    return (w1t, b1, w2t, b2, w3t, b3, w4t, b4, sel)


def idnn_forward(x, params, interp_dim_start, interp_dim_end, *, block_b=8192):
    """IDNN recon-error forward in a single batch-tiled Pallas kernel."""
    s, e = int(interp_dim_start), int(interp_dim_end)
    B, full_d = x.shape
    tgt = e - s
    hidden = params["cw1"].shape[1]
    z_dim = params["cw2"].shape[1]

    # --- batch-tile selection ------------------------------------------------
    # VMEM budget (v7x: 32 MiB scoped / 64 MiB physical): x double-buffer plus
    # the feature-major f32 activation planes, with generous headroom.
    itemsize = jnp.dtype(x.dtype).itemsize
    per_row = 2 * full_d * itemsize + 4 * (2 * hidden + 2 * z_dim + 3 * tgt + 2)
    vmem_cap = max(128, ((16 << 20) // per_row) // 128 * 128)
    block_b = min(block_b, vmem_cap)

    if B <= block_b:
        if B >= 2048:
            # >=2 grid steps so both v7x TensorCores get work (harmless on
            # single-core v5e/v6e).
            tb = _round_up(pl.cdiv(B, 2), 128)
        else:
            tb = _round_up(B, 8)
    else:
        assert block_b % 128 == 0, "block_b must be a multiple of 128"
        tb = block_b
    grid = pl.cdiv(B, tb)

    # No wrapper-side pad of x: Pallas clamps the partial edge block; the
    # output is over-allocated to grid*tb (tiny) and sliced back to B.
    weights = _prep_weights(params, s, e, full_d, x.dtype)

    kernel = functools.partial(idnn_kernel, eps=EPS, inv_tgt=1.0 / tgt)
    out = pl.pallas_call(
        kernel,
        out_shape=jax.ShapeDtypeStruct((1, grid * tb), jnp.float32),
        grid=(grid,),
        in_specs=[pl.BlockSpec((tb, full_d), lambda i: (i, 0))] +
                 [pl.BlockSpec(w.shape, lambda i: (0, 0)) for w in weights],
        out_specs=pl.BlockSpec((1, tb), lambda i: (0, i)),
        compiler_params=pltpu.CompilerParams(
            dimension_semantics=("parallel",)),
    )(x, *weights)
    return out[0, :B]                      # (B,), matching torch .mean(dim=1)


def make_params(key, in_dim, hidden, z_dim, target_dim):
    ks = jax.random.split(key, 8)
    scale = 0.1
    return {
        "cw1": scale * jax.random.normal(ks[0], (in_dim, hidden), jnp.float32),
        "cb1": scale * jax.random.normal(ks[1], (1, hidden), jnp.float32),
        "cw2": scale * jax.random.normal(ks[2], (hidden, z_dim), jnp.float32),
        "cb2": scale * jax.random.normal(ks[3], (1, z_dim), jnp.float32),
        "dw1": scale * jax.random.normal(ks[4], (z_dim, hidden), jnp.float32),
        "db1": scale * jax.random.normal(ks[5], (1, hidden), jnp.float32),
        "dw2": scale * jax.random.normal(ks[6], (hidden, target_dim), jnp.float32),
        "db2": scale * jax.random.normal(ks[7], (1, target_dim), jnp.float32),
    }


def reference_forward(x, params, s, e):
    """Pure-JAX reference mirroring the PyTorch semantics, for verification."""
    input_x = jnp.concatenate([x[:, :s], x[:, e:]], axis=1)
    target_x = x[:, s:e]
    h = jnp.maximum(input_x @ params["cw1"] + params["cb1"], 0.0)
    z = h @ params["cw2"] + params["cb2"]
    z = z / (jnp.linalg.norm(z, axis=1, keepdims=True) + EPS)
    g = jnp.maximum(z @ params["dw1"] + params["db1"], 0.0)
    out_x = g @ params["dw2"] + params["db2"]
    return jnp.mean((target_x - out_x) ** 2, axis=1)


if __name__ == "__main__":
    # full_x: [batch, full_dim=16]; interpolate dims [4, 12) -> target_dim=8,
    # context input dim = 8; contextnet hidden=32, z_dim=16; decoder hidden=32.
    B, FULL_D = 8, 16
    S, E = 4, 12
    TARGET_D = E - S
    IN_D = FULL_D - TARGET_D
    HIDDEN, Z_DIM = 32, 16

    key = jax.random.PRNGKey(0)
    kx, kp, kx2 = jax.random.split(key, 3)
    params = make_params(kp, IN_D, HIDDEN, Z_DIM, TARGET_D)

    # Case 1: small batch, single grid step.
    x = jax.random.normal(kx, (B, FULL_D), jnp.float32)
    recon = jax.block_until_ready(idnn_forward(x, params, S, E))
    ref = reference_forward(x, params, S, E)
    assert recon.shape == (B,)
    assert jnp.allclose(recon, ref, atol=1e-3, rtol=1e-3), (recon, ref)

    # Case 2: non-multiple batch -> multi-step grid + clamped edge block (no pad).
    B2 = 300
    x2 = jax.random.normal(kx2, (B2, FULL_D), jnp.float32)
    recon2 = jax.block_until_ready(idnn_forward(x2, params, S, E, block_b=128))
    ref2 = reference_forward(x2, params, S, E)
    assert recon2.shape == (B2,)
    assert jnp.allclose(recon2, ref2, atol=1e-3, rtol=1e-3), (recon2, ref2)

    # Case 3: bf16 input feed (halves HBM bytes on v5e/v6e); f32 accumulation.
    recon3 = jax.block_until_ready(
        idnn_forward(x2.astype(jnp.bfloat16), params, S, E))
    assert recon3.shape == (B2,)
    assert jnp.allclose(recon3, ref2, atol=5e-2, rtol=5e-2), (recon3, ref2)

    # TODO(synk): loss='l1', encoding/input noise and train-time reg paths are
    # not exercised by forward() (loss='l2', noise=False) and are omitted.
    print("KERNEL_OK")
</pallas_src>

<mosaic_0001>
module attributes {stable_mosaic.version = 11 : i64} {
  func.func @idnn_kernel(%arg0: i32, %arg1: memref<8x16xf32, #tpu.memory_space<vmem>>, %arg2: memref<32x16xf32, #tpu.memory_space<vmem>>, %arg3: memref<32x1xf32, #tpu.memory_space<vmem>>, %arg4: memref<16x32xf32, #tpu.memory_space<vmem>>, %arg5: memref<16x1xf32, #tpu.memory_space<vmem>>, %arg6: memref<32x16xf32, #tpu.memory_space<vmem>>, %arg7: memref<32x1xf32, #tpu.memory_space<vmem>>, %arg8: memref<8x32xf32, #tpu.memory_space<vmem>>, %arg9: memref<8x1xf32, #tpu.memory_space<vmem>>, %arg10: memref<8x16xf32, #tpu.memory_space<vmem>>, %arg11: memref<1x8xf32, #tpu.memory_space<vmem>>) attributes {dimension_semantics = [#tpu.dimension_semantics<parallel>], iteration_bounds = array<i64: 1>, scalar_prefetch = 0 : i64, scratch_operands = 0 : i64, tpu.core_type = #tpu.core_type<tc>, window_params = [{transform_indices = @transform_0, window_bounds = array<i64: 8, 16>}, {pipeline_mode = #tpu.pipeline_mode<synchronous>, transform_indices = @transform_1, window_bounds = array<i64: 32, 16>}, {pipeline_mode = #tpu.pipeline_mode<synchronous>, transform_indices = @transform_2, window_bounds = array<i64: 32, 1>}, {pipeline_mode = #tpu.pipeline_mode<synchronous>, transform_indices = @transform_3, window_bounds = array<i64: 16, 32>}, {pipeline_mode = #tpu.pipeline_mode<synchronous>, transform_indices = @transform_4, window_bounds = array<i64: 16, 1>}, {pipeline_mode = #tpu.pipeline_mode<synchronous>, transform_indices = @transform_5, window_bounds = array<i64: 32, 16>}, {pipeline_mode = #tpu.pipeline_mode<synchronous>, transform_indices = @transform_6, window_bounds = array<i64: 32, 1>}, {pipeline_mode = #tpu.pipeline_mode<synchronous>, transform_indices = @transform_7, window_bounds = array<i64: 8, 32>}, {pipeline_mode = #tpu.pipeline_mode<synchronous>, transform_indices = @transform_8, window_bounds = array<i64: 8, 1>}, {pipeline_mode = #tpu.pipeline_mode<synchronous>, transform_indices = @transform_9, window_bounds = array<i64: 8, 16>}, {transform_indices = @transform_10, window_bounds = array<i64: 1, 8>}]} {
    %c0 = arith.constant 0 : index
    %c0_0 = arith.constant 0 : index
    %0 = vector.load %arg1[%c0, %c0_0] : memref<8x16xf32, #tpu.memory_space<vmem>>, vector<8x16xf32>
    %c0_1 = arith.constant 0 : index
    %c0_2 = arith.constant 0 : index
    %1 = vector.load %arg2[%c0_1, %c0_2] : memref<32x16xf32, #tpu.memory_space<vmem>>, vector<32x16xf32>
    %cst = arith.constant dense<0.000000e+00> : vector<32x8xf32>
    %2 = tpu.matmul %1, %0, %cst {dimension_numbers = #tpu.dot_dimension_numbers<[1], [1], [0], [0], [0, 0, 1, 0], [], []>} : vector<32x16xf32>, vector<8x16xf32>, vector<32x8xf32> -> vector<32x8xf32>
    %c0_3 = arith.constant 0 : index
    %c0_4 = arith.constant 0 : index
    %3 = vector.load %arg3[%c0_3, %c0_4] : memref<32x1xf32, #tpu.memory_space<vmem>>, vector<32x1xf32>
    %4 = vector.broadcast %3 : vector<32x1xf32> to vector<32x8xf32>
    %5 = arith.addf %2, %4 : vector<32x8xf32>
    %cst_5 = arith.constant 0.000000e+00 : f32
    %6 = vector.broadcast %cst_5 : f32 to vector<32x8xf32>
    %7 = arith.maximumf %5, %6 : vector<32x8xf32>
    %c0_6 = arith.constant 0 : index
    %c0_7 = arith.constant 0 : index
    %8 = vector.load %arg4[%c0_6, %c0_7] : memref<16x32xf32, #tpu.memory_space<vmem>>, vector<16x32xf32>
    %cst_8 = arith.constant dense<0.000000e+00> : vector<16x8xf32>
    %9 = tpu.matmul %8, %7, %cst_8 {dimension_numbers = #tpu.dot_dimension_numbers<[1], [0], [0], [1], [0, 0, 1, 1], [], []>} : vector<16x32xf32>, vector<32x8xf32>, vector<16x8xf32> -> vector<16x8xf32>
    %c0_9 = arith.constant 0 : index
    %c0_10 = arith.constant 0 : index
    %10 = vector.load %arg5[%c0_9, %c0_10] : memref<16x1xf32, #tpu.memory_space<vmem>>, vector<16x1xf32>
    %11 = vector.broadcast %10 : vector<16x1xf32> to vector<16x8xf32>
    %12 = arith.addf %9, %11 : vector<16x8xf32>
    %13 = arith.mulf %12, %12 : vector<16x8xf32>
    %cst_11 = arith.constant dense<0.000000e+00> : vector<8xf32>
    %14 = vector.multi_reduction <add>, %13, %cst_11 [0] : vector<16x8xf32> to vector<8xf32>
    %15 = vector.shape_cast %14 : vector<8xf32> to vector<1x8xf32>
    %16 = math.sqrt %15 : vector<1x8xf32>
    %cst_12 = arith.constant 9.99999997E-7 : f32
    %17 = vector.broadcast %cst_12 : f32 to vector<1x8xf32>
    %18 = arith.addf %16, %17 : vector<1x8xf32>
    %cst_13 = arith.constant 1.000000e+00 : f32
    %19 = vector.broadcast %cst_13 : f32 to vector<1x8xf32>
    %20 = arith.divf %19, %18 : vector<1x8xf32>
    %21 = vector.broadcast %20 : vector<1x8xf32> to vector<16x8xf32>
    %22 = arith.mulf %12, %21 : vector<16x8xf32>
    %c0_14 = arith.constant 0 : index
    %c0_15 = arith.constant 0 : index
    %23 = vector.load %arg6[%c0_14, %c0_15] : memref<32x16xf32, #tpu.memory_space<vmem>>, vector<32x16xf32>
    %cst_16 = arith.constant dense<0.000000e+00> : vector<32x8xf32>
    %24 = tpu.matmul %23, %22, %cst_16 {dimension_numbers = #tpu.dot_dimension_numbers<[1], [0], [0], [1], [0, 0, 1, 1], [], []>} : vector<32x16xf32>, vector<16x8xf32>, vector<32x8xf32> -> vector<32x8xf32>
    %c0_17 = arith.constant 0 : index
    %c0_18 = arith.constant 0 : index
    %25 = vector.load %arg7[%c0_17, %c0_18] : memref<32x1xf32, #tpu.memory_space<vmem>>, vector<32x1xf32>
    %26 = vector.broadcast %25 : vector<32x1xf32> to vector<32x8xf32>
    %27 = arith.addf %24, %26 : vector<32x8xf32>
    %cst_19 = arith.constant 0.000000e+00 : f32
    %28 = vector.broadcast %cst_19 : f32 to vector<32x8xf32>
    %29 = arith.maximumf %27, %28 : vector<32x8xf32>
    %c0_20 = arith.constant 0 : index
    %c0_21 = arith.constant 0 : index
    %30 = vector.load %arg8[%c0_20, %c0_21] : memref<8x32xf32, #tpu.memory_space<vmem>>, vector<8x32xf32>
    %cst_22 = arith.constant dense<0.000000e+00> : vector<8x8xf32>
    %31 = tpu.matmul %30, %29, %cst_22 {dimension_numbers = #tpu.dot_dimension_numbers<[1], [0], [0], [1], [0, 0, 1, 1], [], []>} : vector<8x32xf32>, vector<32x8xf32>, vector<8x8xf32> -> vector<8x8xf32>
    %c0_23 = arith.constant 0 : index
    %c0_24 = arith.constant 0 : index
    %32 = vector.load %arg9[%c0_23, %c0_24] : memref<8x1xf32, #tpu.memory_space<vmem>>, vector<8x1xf32>
    %33 = vector.broadcast %32 : vector<8x1xf32> to vector<8x8xf32>
    %34 = arith.addf %31, %33 : vector<8x8xf32>
    %c0_25 = arith.constant 0 : index
    %c0_26 = arith.constant 0 : index
    %35 = vector.load %arg10[%c0_25, %c0_26] : memref<8x16xf32, #tpu.memory_space<vmem>>, vector<8x16xf32>
    %cst_27 = arith.constant dense<0.000000e+00> : vector<8x8xf32>
    %36 = tpu.matmul %35, %0, %cst_27 {dimension_numbers = #tpu.dot_dimension_numbers<[1], [1], [0], [0], [0, 0, 1, 0], [], []>} : vector<8x16xf32>, vector<8x16xf32>, vector<8x8xf32> -> vector<8x8xf32>
    %37 = arith.subf %36, %34 : vector<8x8xf32>
    %38 = arith.mulf %37, %37 : vector<8x8xf32>
    %cst_28 = arith.constant dense<0.000000e+00> : vector<8xf32>
    %39 = vector.multi_reduction <add>, %38, %cst_28 [0] : vector<8x8xf32> to vector<8xf32>
    %40 = vector.shape_cast %39 : vector<8xf32> to vector<1x8xf32>
    %cst_29 = arith.constant 1.250000e-01 : f32
    %41 = vector.broadcast %cst_29 : f32 to vector<1x8xf32>
    %42 = arith.mulf %40, %41 : vector<1x8xf32>
    %c0_30 = arith.constant 0 : index
    %c0_31 = arith.constant 0 : index
    %43 = vector.load %arg11[%c0_30, %c0_31] : memref<1x8xf32, #tpu.memory_space<vmem>>, vector<1x8xf32>
    tpu.vector_store %arg11[%c0_30, %c0_31], %42 {strides = array<i32>} : memref<1x8xf32, #tpu.memory_space<vmem>>, vector<1x8xf32>,
    return
  }
  func.func @transform_0(%arg0: i32) -> (i32, i32) {
    %c0_i32 = arith.constant 0 : i32
    %c0_i32_0 = arith.constant 0 : i32
    return %arg0, %c0_i32 : i32, i32
  }
  func.func @transform_1(%arg0: i32) -> (i32, i32) {
    %c0_i32 = arith.constant 0 : i32
    %c0_i32_0 = arith.constant 0 : i32
    %c0_i32_1 = arith.constant 0 : i32
    return %c0_i32, %c0_i32_0 : i32, i32
  }
  func.func @transform_2(%arg0: i32) -> (i32, i32) {
    %c0_i32 = arith.constant 0 : i32
    %c0_i32_0 = arith.constant 0 : i32
    %c0_i32_1 = arith.constant 0 : i32
    return %c0_i32, %c0_i32_0 : i32, i32
  }
  func.func @transform_3(%arg0: i32) -> (i32, i32) {
    %c0_i32 = arith.constant 0 : i32
    %c0_i32_0 = arith.constant 0 : i32
    %c0_i32_1 = arith.constant 0 : i32
    return %c0_i32, %c0_i32_0 : i32, i32
  }
  func.func @transform_4(%arg0: i32) -> (i32, i32) {
    %c0_i32 = arith.constant 0 : i32
    %c0_i32_0 = arith.constant 0 : i32
    %c0_i32_1 = arith.constant 0 : i32
    return %c0_i32, %c0_i32_0 : i32, i32
  }
  func.func @transform_5(%arg0: i32) -> (i32, i32) {
    %c0_i32 = arith.constant 0 : i32
    %c0_i32_0 = arith.constant 0 : i32
    %c0_i32_1 = arith.constant 0 : i32
    return %c0_i32, %c0_i32_0 : i32, i32
  }
  func.func @transform_6(%arg0: i32) -> (i32, i32) {
    %c0_i32 = arith.constant 0 : i32
    %c0_i32_0 = arith.constant 0 : i32
    %c0_i32_1 = arith.constant 0 : i32
    return %c0_i32, %c0_i32_0 : i32, i32
  }
  func.func @transform_7(%arg0: i32) -> (i32, i32) {
    %c0_i32 = arith.constant 0 : i32
    %c0_i32_0 = arith.constant 0 : i32
    %c0_i32_1 = arith.constant 0 : i32
    return %c0_i32, %c0_i32_0 : i32, i32
  }
  func.func @transform_8(%arg0: i32) -> (i32, i32) {
    %c0_i32 = arith.constant 0 : i32
    %c0_i32_0 = arith.constant 0 : i32
    %c0_i32_1 = arith.constant 0 : i32
    return %c0_i32, %c0_i32_0 : i32, i32
  }
  func.func @transform_9(%arg0: i32) -> (i32, i32) {
    %c0_i32 = arith.constant 0 : i32
    %c0_i32_0 = arith.constant 0 : i32
    %c0_i32_1 = arith.constant 0 : i32
    return %c0_i32, %c0_i32_0 : i32, i32
  }
  func.func @transform_10(%arg0: i32) -> (i32, i32) {
    %c0_i32 = arith.constant 0 : i32
    %c0_i32_0 = arith.constant 0 : i32
    return %c0_i32, %arg0 : i32, i32
  }
}

</mosaic_0001>

<llo_original>
// kernel: tpu_custom_call.1
$region0: #{tpu_custom_call.1}
  #allocation0 [shape = 'u32[]', space=smem, size = 0x4, offset = 0x4, fixed_abs, tag = 'smem constant byte address 0x4 - core index']
  #allocation1 [shape = 'u32[144,128]{1,0:T(1,128)}', space=vmem, size = 0x12000, scoped, tag = 'internal scratch']
  %s0 = inlined_call_operand.vmem [shape: f32[8,16], index: 0, kind: input, shape index: {}]
  %s1 = inlined_call_operand.vmem [shape: f32[32,16], index: 1, kind: input, shape index: {}]
  %s2 = inlined_call_operand.vmem [shape: f32[32,1], index: 2, kind: input, shape index: {}]
  %s3 = inlined_call_operand.vmem [shape: f32[16,32], index: 3, kind: input, shape index: {}]
  %s4 = inlined_call_operand.vmem [shape: f32[16,1], index: 4, kind: input, shape index: {}]
  %s5 = inlined_call_operand.vmem [shape: f32[32,16], index: 5, kind: input, shape index: {}]
  %s6 = inlined_call_operand.vmem [shape: f32[32,1], index: 6, kind: input, shape index: {}]
  %s7 = inlined_call_operand.vmem [shape: f32[8,32], index: 7, kind: input, shape index: {}]
  %s8 = inlined_call_operand.vmem [shape: f32[8,1], index: 8, kind: input, shape index: {}]
  %s9 = inlined_call_operand.vmem [shape: f32[8,16], index: 9, kind: input, shape index: {}]
  %s10 = inlined_call_operand.hbm [shape: f32[1,8], index: 10, kind: output, shape index: {}]
  %s11 = sld [smem:[#allocation0]]
  $region50: #{tpu_custom_call.1} parent=0
    _
  %s13 = ssub.s32 1, %s11
  %s14 = scalar_select 0, %s13, %s11
  $region1: #{tpu_custom_call.1} parent=0
    #allocation2 [shape = 'u8[512]{0}', space=vmem, size = 0x400, scoped, tag = 'output window, operand 0, single buffered']
    #allocation3 [shape = 's32[1]{0}', space=sflag, size = 0x4, scoped, tag = 'scoped memory for tpu_custom_call.1']
    %15 = vsyncpa [#allocation3], 0
    // Predicated region
    $region2: #{tpu_custom_call.1} parent=1 // pred_check
      _
    $region3: #{tpu_custom_call.1} parent=1 // pred_check_branch
      %17 = sbr.rel (0) target = $region5
    $region4: #{tpu_custom_call.1} parent=1 // pred_region
      _
    $region5: #{tpu_custom_call.1} parent=1 // pred_fallthru
      _
    // Predicated region
    $region6: #{tpu_custom_call.1} parent=1 // pred_check
      _
    $region7: #{tpu_custom_call.1} parent=1 // pred_check_branch
      %19 = sbr.rel (0) target = $region9
    $region8: #{tpu_custom_call.1} parent=1 // pred_region
      _
    $region9: #{tpu_custom_call.1} parent=1 // pred_fallthru
      _
    // Predicated region
    $region10: #{tpu_custom_call.1} parent=1 // pred_check
      _
    $region11: #{tpu_custom_call.1} parent=1 // pred_check_branch
      %21 = sbr.rel (0) target = $region13
    $region12: #{tpu_custom_call.1} parent=1 // pred_region
      _
    $region13: #{tpu_custom_call.1} parent=1 // pred_fallthru
      _
    // Predicated region
    $region14: #{tpu_custom_call.1} parent=1 // pred_check
      _
    $region15: #{tpu_custom_call.1} parent=1 // pred_check_branch
      %23 = sbr.rel (0) target = $region17
    $region16: #{tpu_custom_call.1} parent=1 // pred_region
      _
    $region17: #{tpu_custom_call.1} parent=1 // pred_fallthru
      _
    // Predicated region
    $region18: #{tpu_custom_call.1} parent=1 // pred_check
      _
    $region19: #{tpu_custom_call.1} parent=1 // pred_check_branch
      %25 = sbr.rel (0) target = $region21
    $region20: #{tpu_custom_call.1} parent=1 // pred_region
      _
    $region21: #{tpu_custom_call.1} parent=1 // pred_fallthru
      _
    // Predicated region
    $region22: #{tpu_custom_call.1} parent=1 // pred_check
      _
    $region23: #{tpu_custom_call.1} parent=1 // pred_check_branch
      %27 = sbr.rel (0) target = $region25
    $region24: #{tpu_custom_call.1} parent=1 // pred_region
      _
    $region25: #{tpu_custom_call.1} parent=1 // pred_fallthru
      _
    // Predicated region
    $region26: #{tpu_custom_call.1} parent=1 // pred_check
      _
    $region27: #{tpu_custom_call.1} parent=1 // pred_check_branch
      %29 = sbr.rel (0) target = $region29
    $region28: #{tpu_custom_call.1} parent=1 // pred_region
      _
    $region29: #{tpu_custom_call.1} parent=1 // pred_fallthru
      _
    // Predicated region
    $region30: #{tpu_custom_call.1} parent=1 // pred_check
      _
    $region31: #{tpu_custom_call.1} parent=1 // pred_check_branch
      %31 = sbr.rel (0) target = $region33
    $region32: #{tpu_custom_call.1} parent=1 // pred_region
      _
    $region33: #{tpu_custom_call.1} parent=1 // pred_fallthru
      _
    // Predicated region
    $region34: #{tpu_custom_call.1} parent=1 // pred_check
      _
    $region35: #{tpu_custom_call.1} parent=1 // pred_check_branch
      %33 = sbr.rel (0) target = $region37
    $region36: #{tpu_custom_call.1} parent=1 // pred_region
      _
    $region37: #{tpu_custom_call.1} parent=1 // pred_fallthru
      _
    // Predicated region
    $region38: #{tpu_custom_call.1} parent=1 // pred_check
      _
    $region39: #{tpu_custom_call.1} parent=1 // pred_check_branch
      %35 = sbr.rel (0) target = $region41
    $region40: #{tpu_custom_call.1} parent=1 // pred_region
      _
    $region41: #{tpu_custom_call.1} parent=1 // pred_fallthru
      _
    %v36 = vld [vmem:[%s0] sm:$0xff]
    %v37 = vld [vmem:[%s1] sm:$0xff]
    %v38 = vld [vmem:[%s1 + $0x8] sm:$0xff]
    %v39 = vld [vmem:[%s1 + $0x10] sm:$0xff]
    %v40 = vld [vmem:[%s1 + $0x18] sm:$0xff]
    %v41 = vld [vmem:[%s2] sm:$0xff]
    %v42 = vld [vmem:[%s2 + $0x8] sm:$0xff]
    %v43 = vld [vmem:[%s2 + $0x10] sm:$0xff]
    %v44 = vld [vmem:[%s2 + $0x18] sm:$0xff]
    %46 = vset.pattern.permute.xlu0 0
    %47 = vperm.xlu0 %46, %v41
    %v48 = vpop.permute.xlu0 %47
    %51 = vset.pattern.permute.xlu0 0
    %52 = vperm.xlu0 %51, %v42
    %v53 = vpop.permute.xlu0 %52
    %56 = vset.pattern.permute.xlu0 0
    %57 = vperm.xlu0 %56, %v43
    %v58 = vpop.permute.xlu0 %57
    %61 = vset.pattern.permute.xlu0 0
    %62 = vperm.xlu0 %61, %v44
    %v63 = vpop.permute.xlu0 %62
    %vm65 = vcmask 130048
    %v67 = vsel %vm65, %v37, 0
    %v70 = vsel %vm65, %v38, 0
    %v73 = vsel %vm65, %v39, 0
    %v76 = vsel %vm65, %v40, 0
    %v79 = vsel %vm65, %v36, 0
    %81 = vmatprep.subr.mxu0 0.0
    %82 = vmatpush1.xpose.msra.mxu0 %v79
    %83 = vmatprep.subr.mxu0 0.0
    %84 = vmatpush1.xpose.msra.mxu0 0.0
    %85 = vmatprep.subr.mxu0 0.0
    %86 = vmatpush1.xpose.msra.mxu0 0.0
    %87 = vmatprep.subr.mxu0 0.0
    %88 = vmatpush1.xpose.msra.mxu0 0.0
    %89 = vmatprep.subr.mxu0 0.0
    %90 = vmatpush1.xpose.msra.mxu0 0.0
    %91 = vmatprep.subr.mxu0 0.0
    %92 = vmatpush1.xpose.msra.mxu0 0.0
    %93 = vmatprep.subr.mxu0 0.0
    %94 = vmatpush1.xpose.msra.mxu0 0.0
    %95 = vmatprep.subr.mxu0 0.0
    %96 = vmatpush1.xpose.msra.mxu0 0.0
    %97 = vmatprep.subr.mxu0 0.0
    %98 = vmatpush1.xpose.msra.mxu0 0.0
    %99 = vmatprep.subr.mxu0 0.0
    %100 = vmatpush1.xpose.msra.mxu0 0.0
    %101 = vmatprep.subr.mxu0 0.0
    %102 = vmatpush1.xpose.msra.mxu0 0.0
    %103 = vmatprep.subr.mxu0 0.0
    %104 = vmatpush1.xpose.msra.mxu0 0.0
    %105 = vmatprep.subr.mxu0 0.0
    %106 = vmatpush1.xpose.msra.mxu0 0.0
    %107 = vmatprep.subr.mxu0 0.0
    %108 = vmatpush1.xpose.msra.mxu0 0.0
    %109 = vmatprep.subr.mxu0 0.0
    %110 = vmatpush1.xpose.msra.mxu0 0.0
    %111 = vmatprep.subr.mxu0 0.0
    %112 = vmatpush1.xpose.msra.mxu0 0.0
    %113 = vmatprep.subr.mxu0 0.0
    %114 = vmatpush1.xpose.msra.mxu0 0.0
    %115 = vmatprep.subr.mxu0 0.0
    %116 = vmatpush1.xpose.msra.mxu0 0.0
    %117 = vmatprep.subr.mxu0 0.0
    %118 = vmatpush1.xpose.msra.mxu0 0.0
    %119 = vmatprep.subr.mxu0 0.0
    %120 = vmatpush1.xpose.msra.mxu0 0.0
    %121 = vmatprep.subr.mxu0 0.0
    %122 = vmatpush1.xpose.msra.mxu0 0.0
    %123 = vmatprep.subr.mxu0 0.0
    %124 = vmatpush1.xpose.msra.mxu0 0.0
    %125 = vmatprep.subr.mxu0 0.0
    %126 = vmatpush1.xpose.msra.mxu0 0.0
    %127 = vmatprep.subr.mxu0 0.0
    %128 = vmatpush1.xpose.msra.mxu0 0.0
    %129 = vmatprep.subr.mxu0 0.0
    %130 = vmatpush1.xpose.msra.mxu0 0.0
    %131 = vmatprep.subr.mxu0 0.0
    %132 = vmatpush1.xpose.msra.mxu0 0.0
    %133 = vmatprep.subr.mxu0 0.0
    %134 = vmatpush1.xpose.msra.mxu0 0.0
    %135 = vmatprep.subr.mxu0 0.0
    %136 = vmatpush1.xpose.msra.mxu0 0.0
    %137 = vmatprep.subr.mxu0 0.0
    %138 = vmatpush1.xpose.msra.mxu0 0.0
    %139 = vmatprep.subr.mxu0 0.0
    %140 = vmatpush1.xpose.msra.mxu0 0.0
    %141 = vmatprep.subr.mxu0 0.0
    %142 = vmatpush1.xpose.msra.mxu0 0.0
    %143 = vmatprep.subr.mxu0 0.0
    %144 = vmatpush1.xpose.msra.mxu0 0.0
    %145 = vmatprep.mubr.f32.mxu0 0.0
    %146 = vmatmul.mubr.f32.gmra.mrb[0].mxu0 %v67
    %v147 = vpop.f32.mrb[0].mxu0
    %v148 = vadd.f32 %v48, %v147
    %v149 = vpop.f32.mrb[0].mxu0
    %150 = vmatprep.mubr.f32.mxu0 0.0
    %151 = vmatmul.mubr.f32.gmra.mrb[0].mxu0 %v70
    %v152 = vpop.f32.mrb[0].mxu0
    %v153 = vadd.f32 %v53, %v152
    %v154 = vpop.f32.mrb[0].mxu0
    %155 = vmatprep.mubr.f32.mxu0 0.0
    %156 = vmatmul.mubr.f32.gmra.mrb[0].mxu0 %v73
    %v157 = vpop.f32.mrb[0].mxu0
    %v158 = vadd.f32 %v58, %v157
    %v159 = vpop.f32.mrb[0].mxu0
    %160 = vmatprep.mubr.f32.mxu0 0.0
    %161 = vmatmul.mubr.f32.gmra.mrb[0].mxu0 %v76
    %v162 = vpop.f32.mrb[0].mxu0
    %v163 = vadd.f32 %v63, %v162
    %v164 = vpop.f32.mrb[0].mxu0
    %165 = vdwg.mxu0
    %v166 = vmax.f32 %v148, 0.0
    %v167 = vmax.f32 %v153, 0.0
    %v168 = vmax.f32 %v158, 0.0
    %v169 = vmax.f32 %v163, 0.0
    %v170 = vld [vmem:[%s3] sm:$0xff]
    %v171 = vld [vmem:[%s3 + $0x8] sm:$0xff]
    %v172 = vld [vmem:[%s4] sm:$0xff]
    %v173 = vld [vmem:[%s4 + $0x8] sm:$0xff]
    %175 = vset.pattern.permute.xlu0 0
    %176 = vperm.xlu0 %175, %v172
    %v177 = vpop.permute.xlu0 %176
    %180 = vset.pattern.permute.xlu0 0
    %181 = vperm.xlu0 %180, %v173
    %v182 = vpop.permute.xlu0 %181
    %vm184 = vcmask 261120
    %v186 = vsel %vm184, %v170, 0
    %v189 = vsel %vm184, %v171, 0
    %191 = vmatprep.subr.mxu0 0.0
    %192 = vmatpush1.msra.mxu0 %v166
    %193 = vmatprep.subr.mxu0 0.0
    %194 = vmatpush1.msra.mxu0 %v167
    %195 = vmatprep.subr.mxu0 0.0
    %196 = vmatpush1.msra.mxu0 %v168
    %197 = vmatprep.subr.mxu0 0.0
    %198 = vmatpush1.msra.mxu0 %v169
    %199 = vmatprep.subr.mxu0 0.0
    %200 = vmatpush1.msra.mxu0 0.0
    %201 = vmatprep.subr.mxu0 0.0
    %202 = vmatpush1.msra.mxu0 0.0
    %203 = vmatprep.subr.mxu0 0.0
    %204 = vmatpush1.msra.mxu0 0.0
    %205 = vmatprep.subr.mxu0 0.0
    %206 = vmatpush1.msra.mxu0 0.0
    %207 = vmatprep.subr.mxu0 0.0
    %208 = vmatpush1.msra.mxu0 0.0
    %209 = vmatprep.subr.mxu0 0.0
    %210 = vmatpush1.msra.mxu0 0.0
    %211 = vmatprep.subr.mxu0 0.0
    %212 = vmatpush1.msra.mxu0 0.0
    %213 = vmatprep.subr.mxu0 0.0
    %214 = vmatpush1.msra.mxu0 0.0
    %215 = vmatprep.subr.mxu0 0.0
    %216 = vmatpush1.msra.mxu0 0.0
    %217 = vmatprep.subr.mxu0 0.0
    %218 = vmatpush1.msra.mxu0 0.0
    %219 = vmatprep.subr.mxu0 0.0
    %220 = vmatpush1.msra.mxu0 0.0
    %221 = vmatprep.subr.mxu0 0.0
    %222 = vmatpush1.msra.mxu0 0.0
    %223 = vmatprep.subr.mxu0 0.0
    %224 = vmatpush1.msra.mxu0 0.0
    %225 = vmatprep.subr.mxu0 0.0
    %226 = vmatpush1.msra.mxu0 0.0
    %227 = vmatprep.subr.mxu0 0.0
    %228 = vmatpush1.msra.mxu0 0.0
    %229 = vmatprep.subr.mxu0 0.0
    %230 = vmatpush1.msra.mxu0 0.0
    %231 = vmatprep.subr.mxu0 0.0
    %232 = vmatpush1.msra.mxu0 0.0
    %233 = vmatprep.subr.mxu0 0.0
    %234 = vmatpush1.msra.mxu0 0.0
    %235 = vmatprep.subr.mxu0 0.0
    %236 = vmatpush1.msra.mxu0 0.0
    %237 = vmatprep.subr.mxu0 0.0
    %238 = vmatpush1.msra.mxu0 0.0
    %239 = vmatprep.subr.mxu0 0.0
    %240 = vmatpush1.msra.mxu0 0.0
    %241 = vmatprep.subr.mxu0 0.0
    %242 = vmatpush1.msra.mxu0 0.0
    %243 = vmatprep.subr.mxu0 0.0
    %244 = vmatpush1.msra.mxu0 0.0
    %245 = vmatprep.subr.mxu0 0.0
    %246 = vmatpush1.msra.mxu0 0.0
    %247 = vmatprep.subr.mxu0 0.0
    %248 = vmatpush1.msra.mxu0 0.0
    %249 = vmatprep.subr.mxu0 0.0
    %250 = vmatpush1.msra.mxu0 0.0
    %251 = vmatprep.subr.mxu0 0.0
    %252 = vmatpush1.msra.mxu0 0.0
    %253 = vmatprep.subr.mxu0 0.0
    %254 = vmatpush1.msra.mxu0 0.0
    %255 = vmatprep.mubr.f32.mxu0 0.0
    %256 = vmatmul.mubr.f32.gmra.mrb[0].mxu0 %v186
    %v257 = vpop.f32.mrb[0].mxu0
    %v258 = vadd.f32 %v177, %v257
    %v259 = vpop.f32.mrb[0].mxu0
    %260 = vmatprep.mubr.f32.mxu0 0.0
    %261 = vmatmul.mubr.f32.gmra.mrb[0].mxu0 %v189
    %v262 = vpop.f32.mrb[0].mxu0
    %v263 = vadd.f32 %v182, %v262
    %v264 = vpop.f32.mrb[0].mxu0
    %265 = vdwg.mxu0
    %v266 = vmul.f32 %v258, %v258
    %v267 = vmul.f32 %v263, %v263
    %vm268 = vcmask 64512
    %v269 = vsel %vm268, %v266, 0.0
    %v270 = vsel %vm268, %v267, 0.0
    %v271 = vadd.f32 %v269, %v270
    %v272 = vrot.slane %v271, 4
    %v273 = vadd.f32 %v271, %v272
    %v274 = vrot.slane %v273, 2
    %v275 = vadd.f32 %v273, %v274
    %v276 = vrot.slane %v275, 1
    %v277 = vadd.f32 %v275, %v276
    %v278 = vrsqrt.pop %v277
    %v279 = vmul.f32 %v277, %v278
    %vm280 = vcmp.eq.f32.partialorder %v277, inf
    %v281 = vsel %vm280, %v277, %v279
    %vm282 = vcmp.eq.f32.partialorder %v277, 0.0
    %v283 = vand.u32 %v277, 2147483648
    %v284 = vsel %vm282, %v283, %v281
    %v285 = vadd.f32 %v284, 1e-06
    %v286 = vrcp.pop %v285
    %v287 = vmul.f32 1.0, %v286
    %v288 = vmul.f32 %v258, %v287
    %v289 = vmul.f32 %v263, %v287
    %v290 = vld [vmem:[%s5] sm:$0xff]
    %v291 = vld [vmem:[%s5 + $0x8] sm:$0xff]
    %v292 = vld [vmem:[%s5 + $0x10] sm:$0xff]
    %v293 = vld [vmem:[%s5 + $0x18] sm:$0xff]
    %v294 = vld [vmem:[%s6] sm:$0xff]
    %v295 = vld [vmem:[%s6 + $0x8] sm:$0xff]
    %v296 = vld [vmem:[%s6 + $0x10] sm:$0xff]
    %v297 = vld [vmem:[%s6 + $0x18] sm:$0xff]
    %299 = vset.pattern.permute.xlu0 0
    %300 = vperm.xlu0 %299, %v294
    %v301 = vpop.permute.xlu0 %300
    %304 = vset.pattern.permute.xlu0 0
    %305 = vperm.xlu0 %304, %v295
    %v306 = vpop.permute.xlu0 %305
    %309 = vset.pattern.permute.xlu0 0
    %310 = vperm.xlu0 %309, %v296
    %v311 = vpop.permute.xlu0 %310
    %314 = vset.pattern.permute.xlu0 0
    %315 = vperm.xlu0 %314, %v297
    %v316 = vpop.permute.xlu0 %315
    %v319 = vsel %vm65, %v290, 0
    %v322 = vsel %vm65, %v291, 0
    %v325 = vsel %vm65, %v292, 0
    %v328 = vsel %vm65, %v293, 0
    %330 = vmatprep.subr.mxu0 0.0
    %331 = vmatpush1.msra.mxu0 %v288
    %332 = vmatprep.subr.mxu0 0.0
    %333 = vmatpush1.msra.mxu0 %v289
    %334 = vmatprep.subr.mxu0 0.0
    %335 = vmatpush1.msra.mxu0 0.0
    %336 = vmatprep.subr.mxu0 0.0
    %337 = vmatpush1.msra.mxu0 0.0
    %338 = vmatprep.subr.mxu0 0.0
    %339 = vmatpush1.msra.mxu0 0.0
    %340 = vmatprep.subr.mxu0 0.0
    %341 = vmatpush1.msra.mxu0 0.0
    %342 = vmatprep.subr.mxu0 0.0
    %343 = vmatpush1.msra.mxu0 0.0
    %344 = vmatprep.subr.mxu0 0.0
    %345 = vmatpush1.msra.mxu0 0.0
    %346 = vmatprep.subr.mxu0 0.0
    %347 = vmatpush1.msra.mxu0 0.0
    %348 = vmatprep.subr.mxu0 0.0
    %349 = vmatpush1.msra.mxu0 0.0
    %350 = vmatprep.subr.mxu0 0.0
    %351 = vmatpush1.msra.mxu0 0.0
    %352 = vmatprep.subr.mxu0 0.0
    %353 = vmatpush1.msra.mxu0 0.0
    %354 = vmatprep.subr.mxu0 0.0
    %355 = vmatpush1.msra.mxu0 0.0
    %356 = vmatprep.subr.mxu0 0.0
    %357 = vmatpush1.msra.mxu0 0.0
    %358 = vmatprep.subr.mxu0 0.0
    %359 = vmatpush1.msra.mxu0 0.0
    %360 = vmatprep.subr.mxu0 0.0
    %361 = vmatpush1.msra.mxu0 0.0
    %362 = vmatprep.subr.mxu0 0.0
    %363 = vmatpush1.msra.mxu0 0.0
    %364 = vmatprep.subr.mxu0 0.0
    %365 = vmatpush1.msra.mxu0 0.0
    %366 = vmatprep.subr.mxu0 0.0
    %367 = vmatpush1.msra.mxu0 0.0
    %368 = vmatprep.subr.mxu0 0.0
    %369 = vmatpush1.msra.mxu0 0.0
    %370 = vmatprep.subr.mxu0 0.0
    %371 = vmatpush1.msra.mxu0 0.0
    %372 = vmatprep.subr.mxu0 0.0
    %373 = vmatpush1.msra.mxu0 0.0
    %374 = vmatprep.subr.mxu0 0.0
    %375 = vmatpush1.msra.mxu0 0.0
    %376 = vmatprep.subr.mxu0 0.0
    %377 = vmatpush1.msra.mxu0 0.0
    %378 = vmatprep.subr.mxu0 0.0
    %379 = vmatpush1.msra.mxu0 0.0
    %380 = vmatprep.subr.mxu0 0.0
    %381 = vmatpush1.msra.mxu0 0.0
    %382 = vmatprep.subr.mxu0 0.0
    %383 = vmatpush1.msra.mxu0 0.0
    %384 = vmatprep.subr.mxu0 0.0
    %385 = vmatpush1.msra.mxu0 0.0
    %386 = vmatprep.subr.mxu0 0.0
    %387 = vmatpush1.msra.mxu0 0.0
    %388 = vmatprep.subr.mxu0 0.0
    %389 = vmatpush1.msra.mxu0 0.0
    %390 = vmatprep.subr.mxu0 0.0
    %391 = vmatpush1.msra.mxu0 0.0
    %392 = vmatprep.subr.mxu0 0.0
    %393 = vmatpush1.msra.mxu0 0.0
    %394 = vmatprep.mubr.f32.mxu0 0.0
    %395 = vmatmul.mubr.f32.gmra.mrb[0].mxu0 %v319
    %v396 = vpop.f32.mrb[0].mxu0
    %v397 = vadd.f32 %v301, %v396
    %v398 = vpop.f32.mrb[0].mxu0
    %399 = vmatprep.mubr.f32.mxu0 0.0
    %400 = vmatmul.mubr.f32.gmra.mrb[0].mxu0 %v322
    %v401 = vpop.f32.mrb[0].mxu0
    %v402 = vadd.f32 %v306, %v401
    %v403 = vpop.f32.mrb[0].mxu0
    %404 = vmatprep.mubr.f32.mxu0 0.0
    %405 = vmatmul.mubr.f32.gmra.mrb[0].mxu0 %v325
    %v406 = vpop.f32.mrb[0].mxu0
    %v407 = vadd.f32 %v311, %v406
    %v408 = vpop.f32.mrb[0].mxu0
    %409 = vmatprep.mubr.f32.mxu0 0.0
    %410 = vmatmul.mubr.f32.gmra.mrb[0].mxu0 %v328
    %v411 = vpop.f32.mrb[0].mxu0
    %v412 = vadd.f32 %v316, %v411
    %v413 = vpop.f32.mrb[0].mxu0
    %414 = vdwg.mxu0
    %v415 = vmax.f32 %v397, 0.0
    %v416 = vmax.f32 %v402, 0.0
    %v417 = vmax.f32 %v407, 0.0
    %v418 = vmax.f32 %v412, 0.0
    %v419 = vld [vmem:[%s7] sm:$0xff]
    %v420 = vld [vmem:[%s8] sm:$0xff]
    %422 = vset.pattern.permute.xlu0 0
    %423 = vperm.xlu0 %422, %v420
    %v424 = vpop.permute.xlu0 %423
    %v427 = vsel %vm184, %v419, 0
    %429 = vmatprep.subr.mxu0 0.0
    %430 = vmatpush1.msra.mxu0 %v415
    %431 = vmatprep.subr.mxu0 0.0
    %432 = vmatpush1.msra.mxu0 %v416
    %433 = vmatprep.subr.mxu0 0.0
    %434 = vmatpush1.msra.mxu0 %v417
    %435 = vmatprep.subr.mxu0 0.0
    %436 = vmatpush1.msra.mxu0 %v418
    %437 = vmatprep.subr.mxu0 0.0
    %438 = vmatpush1.msra.mxu0 0.0
    %439 = vmatprep.subr.mxu0 0.0
    %440 = vmatpush1.msra.mxu0 0.0
    %441 = vmatprep.subr.mxu0 0.0
    %442 = vmatpush1.msra.mxu0 0.0
    %443 = vmatprep.subr.mxu0 0.0
    %444 = vmatpush1.msra.mxu0 0.0
    %445 = vmatprep.subr.mxu0 0.0
    %446 = vmatpush1.msra.mxu0 0.0
    %447 = vmatprep.subr.mxu0 0.0
    %448 = vmatpush1.msra.mxu0 0.0
    %449 = vmatprep.subr.mxu0 0.0
    %450 = vmatpush1.msra.mxu0 0.0
    %451 = vmatprep.subr.mxu0 0.0
    %452 = vmatpush1.msra.mxu0 0.0
    %453 = vmatprep.subr.mxu0 0.0
    %454 = vmatpush1.msra.mxu0 0.0
    %455 = vmatprep.subr.mxu0 0.0
    %456 = vmatpush1.msra.mxu0 0.0
    %457 = vmatprep.subr.mxu0 0.0
    %458 = vmatpush1.msra.mxu0 0.0
    %459 = vmatprep.subr.mxu0 0.0
    %460 = vmatpush1.msra.mxu0 0.0
    %461 = vmatprep.subr.mxu0 0.0
    %462 = vmatpush1.msra.mxu0 0.0
    %463 = vmatprep.subr.mxu0 0.0
    %464 = vmatpush1.msra.mxu0 0.0
    %465 = vmatprep.subr.mxu0 0.0
    %466 = vmatpush1.msra.mxu0 0.0
    %467 = vmatprep.subr.mxu0 0.0
    %468 = vmatpush1.msra.mxu0 0.0
    %469 = vmatprep.subr.mxu0 0.0
    %470 = vmatpush1.msra.mxu0 0.0
    %471 = vmatprep.subr.mxu0 0.0
    %472 = vmatpush1.msra.mxu0 0.0
    %473 = vmatprep.subr.mxu0 0.0
    %474 = vmatpush1.msra.mxu0 0.0
    %475 = vmatprep.subr.mxu0 0.0
    %476 = vmatpush1.msra.mxu0 0.0
    %477 = vmatprep.subr.mxu0 0.0
    %478 = vmatpush1.msra.mxu0 0.0
    %479 = vmatprep.subr.mxu0 0.0
    %480 = vmatpush1.msra.mxu0 0.0
    %481 = vmatprep.subr.mxu0 0.0
    %482 = vmatpush1.msra.mxu0 0.0
    %483 = vmatprep.subr.mxu0 0.0
    %484 = vmatpush1.msra.mxu0 0.0
    %485 = vmatprep.subr.mxu0 0.0
    %486 = vmatpush1.msra.mxu0 0.0
    %487 = vmatprep.subr.mxu0 0.0
    %488 = vmatpush1.msra.mxu0 0.0
    %489 = vmatprep.subr.mxu0 0.0
    %490 = vmatpush1.msra.mxu0 0.0
    %491 = vmatprep.subr.mxu0 0.0
    %492 = vmatpush1.msra.mxu0 0.0
    %493 = vmatprep.mubr.f32.mxu0 0.0
    %494 = vmatmul.mubr.f32.gmra.mrb[0].mxu0 %v427
    %v495 = vpop.f32.mrb[0].mxu0
    %v496 = vadd.f32 %v424, %v495
    %v497 = vpop.f32.mrb[0].mxu0
    %498 = vdwg.mxu0
    %v499 = vld [vmem:[%s9] sm:$0xff]
    %v501 = vsel %vm65, %v499, 0
    %503 = vmatprep.subr.mxu0 0.0
    %504 = vmatpush1.xpose.msra.mxu0 %v79
    %505 = vmatprep.subr.mxu0 0.0
    %506 = vmatpush1.xpose.msra.mxu0 0.0
    %507 = vmatprep.subr.mxu0 0.0
    %508 = vmatpush1.xpose.msra.mxu0 0.0
    %509 = vmatprep.subr.mxu0 0.0
    %510 = vmatpush1.xpose.msra.mxu0 0.0
    %511 = vmatprep.subr.mxu0 0.0
    %512 = vmatpush1.xpose.msra.mxu0 0.0
    %513 = vmatprep.subr.mxu0 0.0
    %514 = vmatpush1.xpose.msra.mxu0 0.0
    %515 = vmatprep.subr.mxu0 0.0
    %516 = vmatpush1.xpose.msra.mxu0 0.0
    %517 = vmatprep.subr.mxu0 0.0
    %518 = vmatpush1.xpose.msra.mxu0 0.0
    %519 = vmatprep.subr.mxu0 0.0
    %520 = vmatpush1.xpose.msra.mxu0 0.0
    %521 = vmatprep.subr.mxu0 0.0
    %522 = vmatpush1.xpose.msra.mxu0 0.0
    %523 = vmatprep.subr.mxu0 0.0
    %524 = vmatpush1.xpose.msra.mxu0 0.0
    %525 = vmatprep.subr.mxu0 0.0
    %526 = vmatpush1.xpose.msra.mxu0 0.0
    %527 = vmatprep.subr.mxu0 0.0
    %528 = vmatpush1.xpose.msra.mxu0 0.0
    %529 = vmatprep.subr.mxu0 0.0
    %530 = vmatpush1.xpose.msra.mxu0 0.0
    %531 = vmatprep.subr.mxu0 0.0
    %532 = vmatpush1.xpose.msra.mxu0 0.0
    %533 = vmatprep.subr.mxu0 0.0
    %534 = vmatpush1.xpose.msra.mxu0 0.0
    %535 = vmatprep.subr.mxu0 0.0
    %536 = vmatpush1.xpose.msra.mxu0 0.0
    %537 = vmatprep.subr.mxu0 0.0
    %538 = vmatpush1.xpose.msra.mxu0 0.0
    %539 = vmatprep.subr.mxu0 0.0
    %540 = vmatpush1.xpose.msra.mxu0 0.0
    %541 = vmatprep.subr.mxu0 0.0
    %542 = vmatpush1.xpose.msra.mxu0 0.0
    %543 = vmatprep.subr.mxu0 0.0
    %544 = vmatpush1.xpose.msra.mxu0 0.0
    %545 = vmatprep.subr.mxu0 0.0
    %546 = vmatpush1.xpose.msra.mxu0 0.0
    %547 = vmatprep.subr.mxu0 0.0
    %548 = vmatpush1.xpose.msra.mxu0 0.0
    %549 = vmatprep.subr.mxu0 0.0
    %550 = vmatpush1.xpose.msra.mxu0 0.0
    %551 = vmatprep.subr.mxu0 0.0
    %552 = vmatpush1.xpose.msra.mxu0 0.0
    %553 = vmatprep.subr.mxu0 0.0
    %554 = vmatpush1.xpose.msra.mxu0 0.0
    %555 = vmatprep.subr.mxu0 0.0
    %556 = vmatpush1.xpose.msra.mxu0 0.0
    %557 = vmatprep.subr.mxu0 0.0
    %558 = vmatpush1.xpose.msra.mxu0 0.0
    %559 = vmatprep.subr.mxu0 0.0
    %560 = vmatpush1.xpose.msra.mxu0 0.0
    %561 = vmatprep.subr.mxu0 0.0
    %562 = vmatpush1.xpose.msra.mxu0 0.0
    %563 = vmatprep.subr.mxu0 0.0
    %564 = vmatpush1.xpose.msra.mxu0 0.0
    %565 = vmatprep.subr.mxu0 0.0
    %566 = vmatpush1.xpose.msra.mxu0 0.0
    %567 = vmatprep.mubr.f32.mxu0 0.0
    %568 = vmatmul.mubr.f32.gmra.mrb[0].mxu0 %v501
    %v569 = vpop.f32.mrb[0].mxu0
    %v570 = vadd.f32 0.0, %v569
    %v571 = vpop.f32.mrb[0].mxu0
    %572 = vdwg.mxu0
    %v573 = vsub.f32 %v570, %v496
    %v574 = vmul.f32 %v573, %v573
    %v575 = vsel %vm268, %v574, 0.0
    %v576 = vrot.slane %v575, 4
    %v577 = vadd.f32 %v575, %v576
    %v578 = vrot.slane %v577, 2
    %v579 = vadd.f32 %v577, %v578
    %v580 = vrot.slane %v579, 1
    %v581 = vadd.f32 %v579, %v580
    %v582 = vmul.f32 %v581, 0.125
    %vm583 = vcmask 57344
    %584 = vst.msk [vmem:[#allocation2] sm:$0x1] %vm583, %v582
    // Predicated region
    $region42: #{tpu_custom_call.1} parent=1 // pred_check
      _
    $region43: #{tpu_custom_call.1} parent=1 // pred_check_branch
      %586 = sbr.rel (0) target = $region45
    $region44: #{tpu_custom_call.1} parent=1 // pred_region
      %s588 = ssub.s32 16, 16
      %589 = vsyncadd [#allocation3], %s588
      %s591 = sshll.u32 [#allocation2], 4
      %s592 = int_to_ptr.vmem [resolvable:$true] %s591
      %594 = dma.vmem_to_hbm [thread:$0]  %s592, 16, %s10, [#allocation3]
    $region45: #{tpu_custom_call.1} parent=1 // pred_fallthru
      _
    // Predicated region
    $region46: #{tpu_custom_call.1} parent=1 // pred_check
      _
    $region47: #{tpu_custom_call.1} parent=1 // pred_check_branch
      %596 = sbr.rel (0) target = $region49
    $region48: #{tpu_custom_call.1} parent=1 // pred_region
      %597 = dma.done [#allocation3], 16
    $region49: #{tpu_custom_call.1} parent=1 // pred_fallthru
      _
    %598 = vsyncpa [#allocation3], 1

</llo_original>
